<compile_context>
chip_gen: v7x
topology: tpu7x:2x2x1
jax: 0.10.0
libtpu: 0.0.40
codegen_flags: <defaults>
</compile_context>

<pallas_src>
import functools

import jax
import jax.numpy as jnp
from jax import lax
from jax.experimental import pallas as pl
from jax.experimental.pallas import tpu as pltpu


def _normalize_kernel(x_ref, xn_ref):
    """Row-wise L2 normalization (== F.normalize(x), eps=1e-12)."""
    x = x_ref[...].astype(jnp.float32)
    ssq = jnp.sum(x * x, axis=1, keepdims=True)
    # x / max(||x||, 1e-12) == x * rsqrt(max(||x||^2, 1e-24)): one EUP rsqrt
    # per row instead of sqrt + per-element divides.
    xn = x * lax.rsqrt(jnp.maximum(ssq, 1e-24))
    xn_ref[...] = xn.astype(xn_ref.dtype)


def _dws_tile_kernel(xn_ref, xnt_ref, cl_ref, *, tm, n, d,
                     cutoff_sq, nlc_sq, mm_dtype):
    """One (tm, n) row slab of the pairwise distance / argmax work.

    Only the per-row argmax of the negative weights is observable through
    class_label_matrix, and every step of the reference chain after the
    negative-log-weights (global rescale, exp, mask-multiply, +1e-8, row-sum
    normalization) preserves that argmax over the valid entries, so we take
    the argmax directly on the masked negative-log-weights.
    """
    i = pl.program_id(0)

    # Similarity tile on the MXU; rhs is the pre-transposed (d, n) copy so
    # there is no per-tile XLU transpose on the critical loop.
    sim = jnp.dot(xn_ref[...].astype(mm_dtype), xnt_ref[...],
                  preferred_element_type=jnp.float32)
    sim = jnp.minimum(sim, 1.0)

    # Sim-domain math: dist^2 = max(2 - 2*sim, cutoff^2); log(dist) = 0.5*log(dist^2).
    d2 = jnp.maximum(2.0 - 2.0 * sim, cutoff_sq)
    nlw = (0.5 * (2.0 - float(d))) * jnp.log(d2) \
        - (0.5 * float(d - 3)) * jnp.log(jnp.maximum(1.0 - 0.25 * d2, 1e-8))

    # Fused mask: off-diagonal AND dist < nonzero_loss_cutoff (in dist^2 form).
    row_g = i * tm + lax.broadcasted_iota(jnp.int32, (tm, n), 0)
    col = lax.broadcasted_iota(jnp.int32, (tm, n), 1)
    valid = (row_g != col) & (d2 < nlc_sq)

    score = jnp.where(valid, nlw, -jnp.inf)
    row_max = jnp.max(score, axis=1, keepdims=True)
    # First occurrence of the row maximum (torch.argmax semantics); a fully
    # masked row degenerates to column 0.
    neg_idx = jnp.min(jnp.where(score == row_max, col, jnp.int32(n)),
                      axis=1, keepdims=True)

    # class_label_matrix row slab: ones with a zero at [r, neg_idx[r]].
    cl_ref[...] = jnp.where(col == neg_idx, 0.0, 1.0).astype(cl_ref.dtype)


def _pick_row_tile(n):
    for tm in (512, 256, 128, 64, 32, 16, 8):
        if n % tm == 0:
            return tm
    return n  # n not a multiple of 8: fall back to a single full-row block


def distance_weighted_sampling(x, *, cutoff=1e-08, nonzero_loss_cutoff=1.4,
                               normalize=True, use_bf16_matmul=False):
    """Pallas forward of DistanceWeightedSampling. x: (n, d) float32.

    `normalize` is accepted for API parity but does not change the returned
    tensors: it only applies a monotone rescale to the log weights, which the
    per-row argmax (the only thing class_label_matrix observes) is invariant
    to.  `use_bf16_matmul=True` runs the similarity matmul in bf16 on the MXU
    with f32 accumulation (faster on v6e/v7x; may flip near-tie argmaxes).
    """
    del normalize
    n, d = x.shape
    mm_dtype = jnp.bfloat16 if use_bf16_matmul else jnp.float32

    # ---- Pass 1: row-L2 normalization (O(n*d), single block) --------------
    xn = pl.pallas_call(
        _normalize_kernel,
        out_shape=jax.ShapeDtypeStruct((n, d), jnp.float32),
        in_specs=[pl.BlockSpec((n, d), lambda: (0, 0))],
        out_specs=pl.BlockSpec((n, d), lambda: (0, 0)),
    )(x)

    # One-time layout plumbing (outside the hot gridded kernel): pre-transpose
    # the matmul RHS so each row tile is a clean (tm, d) x (d, n) MXU push.
    xnt = jnp.transpose(xn).astype(mm_dtype)

    # ---- Pass 2: tile the O(n^2) work over (tm, n) row slabs ---------------
    # For very large n (working set beyond VMEM) columns should additionally
    # be tiled with a running max / running argmin accumulator (flash-style).
    tm = _pick_row_tile(n)
    grid = (n // tm,)

    mm_bytes = 2 if use_bf16_matmul else 4
    vmem_est = (2 * d * n * mm_bytes      # xn^T operand (double buffered)
                + 2 * tm * d * 4          # xn row tile (double buffered)
                + 2 * tm * n * 4          # output tile (double buffered)
                + 6 * tm * n * 4          # sim / nlw / score intermediates
                + (2 << 20))
    vmem_limit = int(min(max(vmem_est, 32 << 20), 64 << 20))

    kernel = functools.partial(
        _dws_tile_kernel, tm=tm, n=n, d=d,
        cutoff_sq=float(cutoff) ** 2,
        nlc_sq=float(nonzero_loss_cutoff) ** 2,
        mm_dtype=mm_dtype)

    cost = pl.CostEstimate(
        flops=int(2 * n * n * d + 12 * n * n),
        transcendentals=int(2 * n * n),
        bytes_accessed=int(4 * n * d + mm_bytes * n * d + 4 * n * n))

    class_label_matrix = pl.pallas_call(
        kernel,
        out_shape=jax.ShapeDtypeStruct((n, n), jnp.float32),
        grid=grid,
        in_specs=[pl.BlockSpec((tm, d), lambda i: (i, 0)),
                  pl.BlockSpec((d, n), lambda i: (0, 0))],
        out_specs=pl.BlockSpec((tm, n), lambda i: (i, 0)),
        compiler_params=pltpu.CompilerParams(
            dimension_semantics=("parallel",),
            vmem_limit_bytes=vmem_limit),
        cost_estimate=cost,
    )(xn, xnt)

    return xn, class_label_matrix


if __name__ == "__main__":
    # Small deterministic input: n=8 embeddings of dim 32
    key = jax.random.PRNGKey(0)
    x = jax.random.normal(key, (8, 32), dtype=jnp.float32)

    x_norm, class_label_matrix = distance_weighted_sampling(x)
    jax.block_until_ready((x_norm, class_label_matrix))

    assert x_norm.shape == (8, 32) and x_norm.dtype == jnp.float32
    assert class_label_matrix.shape == (8, 8)
    # exactly one zero per row, rest ones
    assert bool(jnp.all(jnp.sum(class_label_matrix, axis=1) == 7.0))
    print("KERNEL_OK")
</pallas_src>

<mosaic_0001>
module attributes {stable_mosaic.version = 11 : i64} {
  func.func @_normalize_kernel(%arg0: memref<8x32xf32, #tpu.memory_space<vmem>>, %arg1: memref<8x32xf32, #tpu.memory_space<vmem>>) attributes {dimension_semantics = [], scalar_prefetch = 0 : i64, scratch_operands = 0 : i64, tpu.core_type = #tpu.core_type<tc>} {
    %c0 = arith.constant 0 : index
    %c0_0 = arith.constant 0 : index
    %0 = vector.load %arg0[%c0, %c0_0] : memref<8x32xf32, #tpu.memory_space<vmem>>, vector<8x32xf32>
    %1 = arith.mulf %0, %0 : vector<8x32xf32>
    %cst = arith.constant dense<0.000000e+00> : vector<8xf32>
    %2 = vector.multi_reduction <add>, %1, %cst [1] : vector<8x32xf32> to vector<8xf32>
    %3 = vector.shape_cast %2 : vector<8xf32> to vector<8x1xf32>
    %cst_1 = arith.constant 1.000000e-24 : f32
    %4 = vector.broadcast %cst_1 : f32 to vector<8x1xf32>
    %5 = arith.maximumf %3, %4 : vector<8x1xf32>
    %6 = math.rsqrt %5 : vector<8x1xf32>
    %7 = vector.broadcast %6 : vector<8x1xf32> to vector<8x32xf32>
    %8 = arith.mulf %0, %7 : vector<8x32xf32>
    %c0_2 = arith.constant 0 : index
    %c0_3 = arith.constant 0 : index
    %9 = vector.load %arg1[%c0_2, %c0_3] : memref<8x32xf32, #tpu.memory_space<vmem>>, vector<8x32xf32>
    tpu.vector_store %arg1[%c0_2, %c0_3], %8 {strides = array<i32>} : memref<8x32xf32, #tpu.memory_space<vmem>>, vector<8x32xf32>,
    return
  }
}

</mosaic_0001>

<llo_original>
// kernel: tpu_custom_call.1
$region0: #{tpu_custom_call.1}
  #allocation0 [shape = 'u32[]', space=smem, size = 0x4, offset = 0x4, fixed_abs, tag = 'smem constant byte address 0x4 - core index']
  #allocation1 [shape = 'u32[144,128]{1,0:T(1,128)}', space=vmem, size = 0x12000, scoped, tag = 'internal scratch']
  %s0 = inlined_call_operand.hbm [shape: f32[8,32], index: 0, kind: input, shape index: {}]
  %s1 = inlined_call_operand.hbm [shape: f32[8,32], index: 1, kind: output, shape index: {}]
  %s2 = sld [smem:[#allocation0]]
  $region18: #{tpu_custom_call.1} parent=0
    _
  %s4 = ssub.s32 1, %s2
  %s5 = scalar_select 0, %s4, %s2
  $region1: #{tpu_custom_call.1} parent=0
    #allocation2 [shape = 'u8[4096]{0}', space=vmem, size = 0x1000, scoped, tag = 'input window, operand 0, single buffered']
    #allocation3 [shape = 's32[1]{0}', space=sflag, size = 0x4, scoped, tag = 'scoped memory for tpu_custom_call.1']
    #allocation4 [shape = 's32[1]{0}', space=sflag, size = 0x4, scoped, tag = 'scoped memory for tpu_custom_call.1']
    #allocation5 [shape = 'u8[4096]{0}', space=vmem, size = 0x1000, scoped, tag = 'output window, operand 0, single buffered']
    %6 = vsyncpa [#allocation3], 0
    %7 = vsyncpa [#allocation4], 0
    // Predicated region
    $region2: #{tpu_custom_call.1} parent=1 // pred_check
      _
    $region3: #{tpu_custom_call.1} parent=1 // pred_check_branch
      %9 = sbr.rel (0) target = $region5
    $region4: #{tpu_custom_call.1} parent=1 // pred_region
      %s11 = ssub.s32 128, 128
      %12 = vsyncadd [#allocation3], %s11
      %s14 = sshll.u32 [#allocation2], 4
      %s15 = int_to_ptr.vmem [resolvable:$true] %s14
      %17 = dma.hbm_to_vmem [thread:$0]  %s0, 128, %s15, [#allocation3]
    $region5: #{tpu_custom_call.1} parent=1 // pred_fallthru
      _
    // Predicated region
    $region6: #{tpu_custom_call.1} parent=1 // pred_check
      _
    $region7: #{tpu_custom_call.1} parent=1 // pred_check_branch
      %19 = sbr.rel (0) target = $region9
    $region8: #{tpu_custom_call.1} parent=1 // pred_region
      %20 = dma.done [#allocation3], 128
    $region9: #{tpu_custom_call.1} parent=1 // pred_fallthru
      _
    %v21 = vld [vmem:[#allocation2] sm:$0xff]
    %v22 = vmul.f32 %v21, %v21
    %vm23 = vcmask 261120
    %v24 = vsel %vm23, %v22, 0.0
    %25 = vadd.xlane.f32.xlu0 %v24
    %v26 = vpop.xlane.xlu0 %25
    %v27 = vmax.f32 %v26, 1e-24
    %v28 = vrsqrt.pop %v27
    %v29 = vmul.f32 %v21, %v28
    %30 = vst.msk [vmem:[#allocation5] sm:$0xff] %vm23, %v29
    // Predicated region
    $region10: #{tpu_custom_call.1} parent=1 // pred_check
      _
    $region11: #{tpu_custom_call.1} parent=1 // pred_check_branch
      %32 = sbr.rel (0) target = $region13
    $region12: #{tpu_custom_call.1} parent=1 // pred_region
      %s34 = ssub.s32 128, 128
      %35 = vsyncadd [#allocation4], %s34
      %s37 = sshll.u32 [#allocation5], 4
      %s38 = int_to_ptr.vmem [resolvable:$true] %s37
      %40 = dma.vmem_to_hbm [thread:$0]  %s38, 128, %s1, [#allocation4]
    $region13: #{tpu_custom_call.1} parent=1 // pred_fallthru
      _
    // Predicated region
    $region14: #{tpu_custom_call.1} parent=1 // pred_check
      _
    $region15: #{tpu_custom_call.1} parent=1 // pred_check_branch
      %42 = sbr.rel (0) target = $region17
    $region16: #{tpu_custom_call.1} parent=1 // pred_region
      %43 = dma.done [#allocation4], 128
    $region17: #{tpu_custom_call.1} parent=1 // pred_fallthru
      _
    %44 = vsyncpa [#allocation3], 1
    %45 = vsyncpa [#allocation4], 1

</llo_original>
